<compile_context>
chip_gen: v6e
topology: v6e:2x2x1
jax: 0.10.0
libtpu: 0.0.40
codegen_flags: <defaults>
</compile_context>

<pallas_src>
import functools

import jax
import jax.numpy as jnp
from jax.experimental import pallas as pl
from jax.experimental.pallas import tpu as pltpu


LANE = 128       # TPU lane width: every feature dim is padded to a multiple of this
TILE = 256       # adj row / contraction tile (MXU-friendly on v6e/v7x, 2x128 on v5e)
NEG_INF = -1e30  # finite "-inf" masking padded logit columns before log_softmax


def _round_up(x, m):
    return ((x + m - 1) // m) * m


def gin_layer_kernel(adj_ref, x_ref, w_ref, b_ref, o_ref, acc_ref, *, activation):
    """One GINConv(eps=0) layer:  out = act( ((A+I) @ x) @ W + b ).

    grid = (row_tiles, k_tiles); k (last, 'arbitrary') is the contraction over
    adj columns, the row axis is 'parallel' (megacore). The [tm, f_in] f32
    aggregation accumulator lives in VMEM scratch; the linear + activation
    epilogue runs once per row tile at k == last.
    """
    k = pl.program_id(1)

    @pl.when(k == 0)
    def _():
        acc_ref[...] = jnp.zeros_like(acc_ref)

    # adj tile arrives as bf16 (lossless for edge counts + self-loop); upcast in
    # VMEM so aggregation matches the f32 reference numerics exactly.
    adj = adj_ref[...].astype(jnp.float32)
    acc_ref[...] += jnp.dot(adj, x_ref[...], preferred_element_type=jnp.float32)

    @pl.when(k == pl.num_programs(1) - 1)
    def _():
        z = jnp.dot(acc_ref[...], w_ref[...],
                    preferred_element_type=jnp.float32) + b_ref[...]
        if activation == "relu":
            o_ref[...] = jnp.maximum(z, 0.0)
        else:
            # log_softmax over the (lane-padded) feature axis. Padded logit
            # columns carry a -1e30 bias, so exp(...) underflows to 0 and the
            # normalizer only sees the real out_dim columns.
            m = jnp.max(z, axis=1, keepdims=True)
            s = z - m
            lse = jnp.log(jnp.sum(jnp.exp(s), axis=1, keepdims=True))
            o_ref[...] = s - lse


def _gin_layer(adj_p, feat, w, b, *, activation, tm, tk):
    n_pad = adj_p.shape[0]
    f_in = feat.shape[1]
    f_out = w.shape[1]
    grid = (n_pad // tm, n_pad // tk)

    flops = 2 * n_pad * n_pad * f_in + 2 * n_pad * f_in * f_out
    transcendentals = n_pad * f_out if activation == "log_softmax" else 0
    bytes_accessed = int(adj_p.size * adj_p.dtype.itemsize
                         + feat.size * 4 * grid[0]   # features re-streamed per row tile
                         + w.size * 4 + b.size * 4
                         + n_pad * f_out * 4)

    return pl.pallas_call(
        functools.partial(gin_layer_kernel, activation=activation),
        out_shape=jax.ShapeDtypeStruct((n_pad, f_out), jnp.float32),
        grid_spec=pltpu.PrefetchScalarGridSpec(
            num_scalar_prefetch=0,
            grid=grid,
            in_specs=[
                pl.BlockSpec((tm, tk), lambda i, k: (i, k)),       # A+I tile (bf16)
                pl.BlockSpec((tk, f_in), lambda i, k: (k, 0)),     # feature rows
                pl.BlockSpec((f_in, f_out), lambda i, k: (0, 0)),  # W (padded)
                pl.BlockSpec((1, f_out), lambda i, k: (0, 0)),     # b (padded)
            ],
            out_specs=pl.BlockSpec((tm, f_out), lambda i, k: (i, 0)),
            scratch_shapes=[pltpu.VMEM((tm, f_in), jnp.float32)],
        ),
        compiler_params=pltpu.CompilerParams(
            dimension_semantics=("parallel", "arbitrary"),
            vmem_limit_bytes=32 * 1024 * 1024,
        ),
        cost_estimate=pl.CostEstimate(
            flops=flops,
            transcendentals=transcendentals,
            bytes_accessed=bytes_accessed),
    )(adj_p, feat, w, b)


def pyg_gin_forward(adj, x, w1, b1, w2, b2, *, tile=TILE):
    """Forward of PYG_GIN.  adj[dst, src] = edge multiplicity (no self-loops)."""
    N, in_dim = x.shape
    hidden = w1.shape[1]
    out_dim = w2.shape[1]

    n_pad = _round_up(max(N, 1), tile)
    f_in = _round_up(in_dim, LANE)
    f_hid = _round_up(hidden, LANE)
    f_out = _round_up(out_dim, LANE)

    # Fold the eps=0 self-loop into the adjacency, cast to bf16 (lossless for
    # integer multiplicities + 1 up to 256), zero-pad to the tiled size.
    adj_si = (adj + jnp.eye(N, dtype=adj.dtype)).astype(jnp.bfloat16)
    adj_p = jnp.zeros((n_pad, n_pad), jnp.bfloat16).at[:N, :N].set(adj_si)

    # Zero-pad features / weights to lane-dense widths (zeros contribute 0).
    x_p = jnp.zeros((n_pad, f_in), jnp.float32).at[:N, :in_dim].set(x)
    w1_p = jnp.zeros((f_in, f_hid), jnp.float32).at[:in_dim, :hidden].set(w1)
    b1_p = jnp.zeros((1, f_hid), jnp.float32).at[0, :hidden].set(b1)
    w2_p = jnp.zeros((f_hid, f_out), jnp.float32).at[:hidden, :out_dim].set(w2)
    # Padded logit columns get a -1e30 bias so log_softmax ignores them.
    b2_p = jnp.full((1, f_out), NEG_INF, jnp.float32).at[0, :out_dim].set(b2)

    # Layer 1: h = relu(((A+I) @ x) @ W1 + b1)
    h = _gin_layer(adj_p, x_p, w1_p, b1_p, activation="relu", tm=tile, tk=tile)
    # Layer 2: out = log_softmax(((A+I) @ h) @ W2 + b2)
    # TODO(synk): h round-trips HBM between the two calls (N x 128 f32, tiny vs
    # the two O(N^2) adj passes); a single call with a leading layer grid axis
    # could keep h VMEM-resident but would forfeit the 'parallel' row axis on
    # v7x's two TensorCores (scratch is per-core).
    z = _gin_layer(adj_p, h, w2_p, b2_p, activation="log_softmax", tm=tile, tk=tile)

    return z[:N, :out_dim]


def reference(adj, x, w1, b1, w2, b2):
    h = jnp.maximum((adj @ x + x) @ w1 + b1, 0.0)
    z = (adj @ h + h) @ w2 + b2
    return jax.nn.log_softmax(z, axis=1)


if __name__ == "__main__":
    key = jax.random.PRNGKey(0)
    N, E = 16, 48            # nodes, edges
    in_dim, gcn_hidden, out_dim = 8, 32, 8

    k_x, k_src, k_dst, k_w1, k_b1, k_w2, k_b2 = jax.random.split(key, 7)

    # Node features and a random edge_index [2, E] (src row 0, dst row 1).
    x = jax.random.normal(k_x, (N, in_dim), dtype=jnp.float32)
    src = jax.random.randint(k_src, (E,), 0, N)
    dst = jax.random.randint(k_dst, (E,), 0, N)

    # Dense adjacency-count matrix: A[dst, src] += 1  (host-side glue).
    adj = jnp.zeros((N, N), dtype=jnp.float32).at[dst, src].add(1.0)
    # bf16 adjacency is exact for integer multiplicities (+ self-loop) <= 256.
    assert int(jnp.max(adj)) + 1 <= 256

    # Deterministic Linear params (stored already transposed: [in, out]).
    w1 = jax.random.normal(k_w1, (in_dim, gcn_hidden), dtype=jnp.float32) * 0.1
    b1 = jax.random.normal(k_b1, (gcn_hidden,), dtype=jnp.float32) * 0.1
    w2 = jax.random.normal(k_w2, (gcn_hidden, out_dim), dtype=jnp.float32) * 0.1
    b2 = jax.random.normal(k_b2, (out_dim,), dtype=jnp.float32) * 0.1

    out = jax.block_until_ready(pyg_gin_forward(adj, x, w1, b1, w2, b2))

    ref = reference(adj, x, w1, b1, w2, b2)
    assert out.shape == (N, out_dim)
    assert jnp.allclose(out, ref, atol=1e-3, rtol=1e-3), (
        "mismatch vs reference, max abs err = "
        + str(float(jnp.max(jnp.abs(out - ref)))))

    print("KERNEL_OK")
</pallas_src>

<mosaic_0001>
module attributes {stable_mosaic.version = 11 : i64} {
  func.func @gin_layer_kernel(%arg0: i32, %arg1: i32, %arg2: memref<256x256xbf16, #tpu.memory_space<vmem>>, %arg3: memref<256x128xf32, #tpu.memory_space<vmem>>, %arg4: memref<128x128xf32, #tpu.memory_space<vmem>>, %arg5: memref<1x128xf32, #tpu.memory_space<vmem>>, %arg6: memref<256x128xf32, #tpu.memory_space<vmem>>, %arg7: memref<256x128xf32, #tpu.memory_space<vmem>>) attributes {dimension_semantics = [#tpu.dimension_semantics<parallel>, #tpu.dimension_semantics<arbitrary>], iteration_bounds = array<i64: 1, 1>, scalar_prefetch = 0 : i64, scratch_operands = 1 : i64, tpu.core_type = #tpu.core_type<tc>, window_params = [{transform_indices = @transform_0, window_bounds = array<i64: 256, 256>}, {transform_indices = @transform_1, window_bounds = array<i64: 256, 128>}, {pipeline_mode = #tpu.pipeline_mode<synchronous>, transform_indices = @transform_2, window_bounds = array<i64: 128, 128>}, {pipeline_mode = #tpu.pipeline_mode<synchronous>, transform_indices = @transform_3, window_bounds = array<i64: 1, 128>}, {transform_indices = @transform_4, window_bounds = array<i64: 256, 128>}]} {
    %c0_i32 = arith.constant 0 : i32
    %0 = arith.cmpi eq, %arg1, %c0_i32 : i32
    %1 = arith.extui %0 : i1 to i32
    %c0_i32_0 = arith.constant 0 : i32
    %2 = arith.cmpi ne, %1, %c0_i32_0 : i32
    scf.if %2 {
      %cst_10 = arith.constant 0.000000e+00 : f32
      %13 = vector.broadcast %cst_10 : f32 to vector<256x128xf32>
      %c0_11 = arith.constant 0 : index
      %c0_12 = arith.constant 0 : index
      %14 = vector.load %arg7[%c0_11, %c0_12] : memref<256x128xf32, #tpu.memory_space<vmem>>, vector<256x128xf32>
      tpu.vector_store %arg7[%c0_11, %c0_12], %13 {strides = array<i32>} : memref<256x128xf32, #tpu.memory_space<vmem>>, vector<256x128xf32>,
    } else {
    }
    %c0 = arith.constant 0 : index
    %c0_1 = arith.constant 0 : index
    %3 = vector.load %arg2[%c0, %c0_1] : memref<256x256xbf16, #tpu.memory_space<vmem>>, vector<256x256xbf16>
    %4 = arith.extf %3 : vector<256x256xbf16> to vector<256x256xf32>
    %c0_2 = arith.constant 0 : index
    %c0_3 = arith.constant 0 : index
    %5 = vector.load %arg7[%c0_2, %c0_3] : memref<256x128xf32, #tpu.memory_space<vmem>>, vector<256x128xf32>
    %c0_4 = arith.constant 0 : index
    %c0_5 = arith.constant 0 : index
    %6 = vector.load %arg3[%c0_4, %c0_5] : memref<256x128xf32, #tpu.memory_space<vmem>>, vector<256x128xf32>
    %cst = arith.constant dense<0.000000e+00> : vector<256x128xf32>
    %7 = tpu.matmul %4, %6, %cst {dimension_numbers = #tpu.dot_dimension_numbers<[1], [0], [0], [1], [0, 0, 1, 1], [], []>} : vector<256x256xf32>, vector<256x128xf32>, vector<256x128xf32> -> vector<256x128xf32>
    %8 = arith.addf %5, %7 : vector<256x128xf32>
    %c0_6 = arith.constant 0 : index
    %c0_7 = arith.constant 0 : index
    %9 = vector.load %arg7[%c0_6, %c0_7] : memref<256x128xf32, #tpu.memory_space<vmem>>, vector<256x128xf32>
    tpu.vector_store %arg7[%c0_6, %c0_7], %8 {strides = array<i32>} : memref<256x128xf32, #tpu.memory_space<vmem>>, vector<256x128xf32>,
    %c0_i32_8 = arith.constant 0 : i32
    %10 = arith.cmpi eq, %arg1, %c0_i32_8 : i32
    %11 = arith.extui %10 : i1 to i32
    %c0_i32_9 = arith.constant 0 : i32
    %12 = arith.cmpi ne, %11, %c0_i32_9 : i32
    scf.if %12 {
      %c0_10 = arith.constant 0 : index
      %c0_11 = arith.constant 0 : index
      %13 = vector.load %arg7[%c0_10, %c0_11] : memref<256x128xf32, #tpu.memory_space<vmem>>, vector<256x128xf32>
      %c0_12 = arith.constant 0 : index
      %c0_13 = arith.constant 0 : index
      %14 = vector.load %arg4[%c0_12, %c0_13] : memref<128x128xf32, #tpu.memory_space<vmem>>, vector<128x128xf32>
      %cst_14 = arith.constant dense<0.000000e+00> : vector<256x128xf32>
      %15 = tpu.matmul %13, %14, %cst_14 {dimension_numbers = #tpu.dot_dimension_numbers<[1], [0], [0], [1], [0, 0, 1, 1], [], []>} : vector<256x128xf32>, vector<128x128xf32>, vector<256x128xf32> -> vector<256x128xf32>
      %c0_15 = arith.constant 0 : index
      %c0_16 = arith.constant 0 : index
      %16 = vector.load %arg5[%c0_15, %c0_16] : memref<1x128xf32, #tpu.memory_space<vmem>>, vector<1x128xf32>
      %17 = vector.broadcast %16 : vector<1x128xf32> to vector<256x128xf32>
      %18 = arith.addf %15, %17 : vector<256x128xf32>
      %cst_17 = arith.constant 0.000000e+00 : f32
      %19 = vector.broadcast %cst_17 : f32 to vector<256x128xf32>
      %20 = arith.maximumf %18, %19 : vector<256x128xf32>
      %c0_18 = arith.constant 0 : index
      %c0_19 = arith.constant 0 : index
      %21 = vector.load %arg6[%c0_18, %c0_19] : memref<256x128xf32, #tpu.memory_space<vmem>>, vector<256x128xf32>
      tpu.vector_store %arg6[%c0_18, %c0_19], %20 {strides = array<i32>} : memref<256x128xf32, #tpu.memory_space<vmem>>, vector<256x128xf32>,
    } else {
    }
    return
  }
  func.func @transform_0(%arg0: i32, %arg1: i32) -> (i32, i32) {
    %c0_i32 = arith.constant 0 : i32
    return %arg0, %arg1 : i32, i32
  }
  func.func @transform_1(%arg0: i32, %arg1: i32) -> (i32, i32) {
    %c0_i32 = arith.constant 0 : i32
    %c0_i32_0 = arith.constant 0 : i32
    return %arg1, %c0_i32 : i32, i32
  }
  func.func @transform_2(%arg0: i32, %arg1: i32) -> (i32, i32) {
    %c0_i32 = arith.constant 0 : i32
    %c0_i32_0 = arith.constant 0 : i32
    %c0_i32_1 = arith.constant 0 : i32
    return %c0_i32, %c0_i32_0 : i32, i32
  }
  func.func @transform_3(%arg0: i32, %arg1: i32) -> (i32, i32) {
    %c0_i32 = arith.constant 0 : i32
    %c0_i32_0 = arith.constant 0 : i32
    %c0_i32_1 = arith.constant 0 : i32
    return %c0_i32, %c0_i32_0 : i32, i32
  }
  func.func @transform_4(%arg0: i32, %arg1: i32) -> (i32, i32) {
    %c0_i32 = arith.constant 0 : i32
    %c0_i32_0 = arith.constant 0 : i32
    return %arg0, %c0_i32 : i32, i32
  }
}

</mosaic_0001>

<llo_original>
// kernel: tpu_custom_call.1
$region0: #{tpu_custom_call.1}
  #allocation0 [shape = 'u32[]', space=smem, size = 0x4, offset = 0x4, fixed_abs, tag = 'smem constant byte address 0x4 - core index']
  #allocation1 [shape = 'u32[144,128]{1,0:T(1,128)}', space=vmem, size = 0x12000, scoped, tag = 'internal scratch']
  #allocation2 [shape = 'f32[256,128]{1,0:T(8,128)}', space=vmem, size = 0x20000, scoped, tag = 'scratch operand']
  %s0 = inlined_call_operand.hbm [shape: bf16[256,256], index: 0, kind: input, shape index: {}]
  %s1 = inlined_call_operand.hbm [shape: f32[256,128], index: 1, kind: input, shape index: {}]
  %s2 = inlined_call_operand.hbm [shape: f32[128,128], index: 2, kind: input, shape index: {}]
  %s3 = inlined_call_operand.vmem [shape: f32[1,128], index: 3, kind: input, shape index: {}]
  %s4 = inlined_call_operand.hbm [shape: f32[256,128], index: 4, kind: output, shape index: {}]
  %s5 = sld [smem:[#allocation0]]
  $region46: #{tpu_custom_call.1} parent=0
    _
  %s7 = ssub.s32 1, %s5
  %s8 = scalar_select 0, %s7, %s5
  $region1: #{tpu_custom_call.1} parent=0
    #allocation3 [shape = 'u8[131072]{0}', space=vmem, size = 0x20000, scoped, tag = 'input window, operand 0, single buffered']
    #allocation4 [shape = 's32[1]{0}', space=sflag, size = 0x4, scoped, tag = 'scoped memory for tpu_custom_call.1']
    #allocation5 [shape = 's32[1]{0}', space=sflag, size = 0x4, scoped, tag = 'scoped memory for tpu_custom_call.1']
    #allocation6 [shape = 'u8[131072]{0}', space=vmem, size = 0x20000, scoped, tag = 'input window, operand 1, single buffered']
    #allocation7 [shape = 's32[1]{0}', space=sflag, size = 0x4, scoped, tag = 'scoped memory for tpu_custom_call.1']
    #allocation8 [shape = 'u8[65536]{0}', space=vmem, size = 0x10000, scoped, tag = 'input window, operand 2, single buffered']
    #allocation9 [shape = 'u8[131072]{0}', space=vmem, size = 0x20000, scoped, tag = 'output window, operand 0, single buffered']
    %9 = vsyncpa [#allocation4], 0
    %10 = vsyncpa [#allocation7], 0
    %11 = vsyncpa [#allocation5], 0
    // Predicated region
    $region2: #{tpu_custom_call.1} parent=1 // pred_check
      _
    $region3: #{tpu_custom_call.1} parent=1 // pred_check_branch
      %13 = sbr.rel (0) target = $region5
    $region4: #{tpu_custom_call.1} parent=1 // pred_region
      %s15 = ssub.s32 4096, 4096
      %16 = vsyncadd [#allocation4], %s15
      %s17 = sshll.u32 [#allocation3], 4
      %s18 = int_to_ptr.vmem [resolvable:$true] %s17
      %23 = dma.hbm_to_vmem [thread:$0]  %s0, 4096, %s18, [#allocation4], 128, 128, 8
    $region5: #{tpu_custom_call.1} parent=1 // pred_fallthru
      _
    // Predicated region
    $region6: #{tpu_custom_call.1} parent=1 // pred_check
      _
    $region7: #{tpu_custom_call.1} parent=1 // pred_check_branch
      %25 = sbr.rel (0) target = $region9
    $region8: #{tpu_custom_call.1} parent=1 // pred_region
      %s27 = ssub.s32 4096, 4096
      %28 = vsyncadd [#allocation7], %s27
      %s29 = sshll.u32 [#allocation6], 4
      %s30 = int_to_ptr.vmem [resolvable:$true] %s29
      %35 = dma.hbm_to_vmem [thread:$0]  %s1, 4096, %s30, [#allocation7], 128, 128, 8
    $region9: #{tpu_custom_call.1} parent=1 // pred_fallthru
      _
    // Predicated region
    $region10: #{tpu_custom_call.1} parent=1 // pred_check
      _
    $region11: #{tpu_custom_call.1} parent=1 // pred_check_branch
      %37 = sbr.rel (0) target = $region13
    $region12: #{tpu_custom_call.1} parent=1 // pred_region
      %s39 = ssub.s32 2048, 2048
      %40 = vsyncadd [#allocation7], %s39
      %s41 = sshll.u32 [#allocation8], 4
      %s42 = int_to_ptr.vmem [resolvable:$true] %s41
      %47 = dma.hbm_to_vmem [thread:$0]  %s2, 2048, %s42, [#allocation7], 128, 128, 8
    $region13: #{tpu_custom_call.1} parent=1 // pred_fallthru
      _
    // Predicated region
    $region14: #{tpu_custom_call.1} parent=1 // pred_check
      _
    $region15: #{tpu_custom_call.1} parent=1 // pred_check_branch
      %49 = sbr.rel (0) target = $region17
    $region16: #{tpu_custom_call.1} parent=1 // pred_region
      _
    $region17: #{tpu_custom_call.1} parent=1 // pred_fallthru
      _
    // Predicated region
    $region18: #{tpu_custom_call.1} parent=1 // pred_check
      _
    $region19: #{tpu_custom_call.1} parent=1 // pred_check_branch
      %51 = sbr.rel (0) target = $region21
    $region20: #{tpu_custom_call.1} parent=1 // pred_region
      %52 = dma.done [#allocation4], 4096
    $region21: #{tpu_custom_call.1} parent=1 // pred_fallthru
      _
    // Predicated region
    $region22: #{tpu_custom_call.1} parent=1 // pred_check
      _
    $region23: #{tpu_custom_call.1} parent=1 // pred_check_branch
      %54 = sbr.rel (0) target = $region25
    $region24: #{tpu_custom_call.1} parent=1 // pred_region
      %55 = dma.done [#allocation7], 4096
    $region25: #{tpu_custom_call.1} parent=1 // pred_fallthru
      _
    // Predicated region
    $region26: #{tpu_custom_call.1} parent=1 // pred_check
      _
    $region27: #{tpu_custom_call.1} parent=1 // pred_check_branch
      %57 = sbr.rel (0) target = $region29
    $region28: #{tpu_custom_call.1} parent=1 // pred_region
      %58 = dma.done [#allocation7], 2048
    $region29: #{tpu_custom_call.1} parent=1 // pred_fallthru
      _
    %p59 = scmp.eq.s32.totalorder 0, 0
    // Predicated region
    $region30: #{tpu_custom_call.1} parent=1 // pred_check
      %p60 = pneg %p59
    $region31: #{tpu_custom_call.1} parent=1 // pred_check_branch
      %62 = sbr.rel (%p60) target = $region33
    $region32: #{tpu_custom_call.1} parent=1 // pred_region
      %63 = vst [vmem:[#allocation2] sm:$0xff] 0.0
      %64 = vst [vmem:[#allocation2 + $0x8] sm:$0xff] 0.0
      %65 = vst [vmem:[#allocation2 + $0x10] sm:$0xff] 0.0
      %66 = vst [vmem:[#allocation2 + $0x18] sm:$0xff] 0.0
      %67 = vst [vmem:[#allocation2 + $0x20] sm:$0xff] 0.0
      %68 = vst [vmem:[#allocation2 + $0x28] sm:$0xff] 0.0
      %69 = vst [vmem:[#allocation2 + $0x30] sm:$0xff] 0.0
      %70 = vst [vmem:[#allocation2 + $0x38] sm:$0xff] 0.0
      %71 = vst [vmem:[#allocation2 + $0x40] sm:$0xff] 0.0
      %72 = vst [vmem:[#allocation2 + $0x48] sm:$0xff] 0.0
      %73 = vst [vmem:[#allocation2 + $0x50] sm:$0xff] 0.0
      %74 = vst [vmem:[#allocation2 + $0x58] sm:$0xff] 0.0
      %75 = vst [vmem:[#allocation2 + $0x60] sm:$0xff] 0.0
      %76 = vst [vmem:[#allocation2 + $0x68] sm:$0xff] 0.0
      %77 = vst [vmem:[#allocation2 + $0x70] sm:$0xff] 0.0
      %78 = vst [vmem:[#allocation2 + $0x78] sm:$0xff] 0.0
      %79 = vst [vmem:[#allocation2 + $0x80] sm:$0xff] 0.0
      %80 = vst [vmem:[#allocation2 + $0x88] sm:$0xff] 0.0
      %81 = vst [vmem:[#allocation2 + $0x90] sm:$0xff] 0.0
      %82 = vst [vmem:[#allocation2 + $0x98] sm:$0xff] 0.0
      %83 = vst [vmem:[#allocation2 + $0xa0] sm:$0xff] 0.0
      %84 = vst [vmem:[#allocation2 + $0xa8] sm:$0xff] 0.0
      %85 = vst [vmem:[#allocation2 + $0xb0] sm:$0xff] 0.0
      %86 = vst [vmem:[#allocation2 + $0xb8] sm:$0xff] 0.0
      %87 = vst [vmem:[#allocation2 + $0xc0] sm:$0xff] 0.0
      %88 = vst [vmem:[#allocation2 + $0xc8] sm:$0xff] 0.0
      %89 = vst [vmem:[#allocation2 + $0xd0] sm:$0xff] 0.0
      %90 = vst [vmem:[#allocation2 + $0xd8] sm:$0xff] 0.0
      %91 = vst [vmem:[#allocation2 + $0xe0] sm:$0xff] 0.0
      %92 = vst [vmem:[#allocation2 + $0xe8] sm:$0xff] 0.0
      %93 = vst [vmem:[#allocation2 + $0xf0] sm:$0xff] 0.0
      %94 = vst [vmem:[#allocation2 + $0xf8] sm:$0xff] 0.0
    $region33: #{tpu_custom_call.1} parent=1 // pred_fallthru
      _
    %v95 = vld [vmem:[#allocation3] sm:$0xff]
    %v96 = vld [vmem:[#allocation3 + $0x8] sm:$0xff]
    %v97 = vld [vmem:[#allocation3 + $0x10] sm:$0xff]
    %v98 = vld [vmem:[#allocation3 + $0x18] sm:$0xff]
    %v99 = vld [vmem:[#allocation3 + $0x20] sm:$0xff]
    %v100 = vld [vmem:[#allocation3 + $0x28] sm:$0xff]
    %v101 = vld [vmem:[#allocation3 + $0x30] sm:$0xff]
    %v102 = vld [vmem:[#allocation3 + $0x38] sm:$0xff]
    %v103 = vld [vmem:[#allocation3 + $0x40] sm:$0xff]
    %v104 = vld [vmem:[#allocation3 + $0x48] sm:$0xff]
    %v105 = vld [vmem:[#allocation3 + $0x50] sm:$0xff]
    %v106 = vld [vmem:[#allocation3 + $0x58] sm:$0xff]
    %v107 = vld [vmem:[#allocation3 + $0x60] sm:$0xff]
    %v108 = vld [vmem:[#allocation3 + $0x68] sm:$0xff]
    %v109 = vld [vmem:[#allocation3 + $0x70] sm:$0xff]
    %v110 = vld [vmem:[#allocation3 + $0x78] sm:$0xff]
    %v111 = vld [vmem:[#allocation3 + $0x80] sm:$0xff]
    %v112 = vld [vmem:[#allocation3 + $0x88] sm:$0xff]
    %v113 = vld [vmem:[#allocation3 + $0x90] sm:$0xff]
    %v114 = vld [vmem:[#allocation3 + $0x98] sm:$0xff]
    %v115 = vld [vmem:[#allocation3 + $0xa0] sm:$0xff]
    %v116 = vld [vmem:[#allocation3 + $0xa8] sm:$0xff]
    %v117 = vld [vmem:[#allocation3 + $0xb0] sm:$0xff]
    %v118 = vld [vmem:[#allocation3 + $0xb8] sm:$0xff]
    %v119 = vld [vmem:[#allocation3 + $0xc0] sm:$0xff]
    %v120 = vld [vmem:[#allocation3 + $0xc8] sm:$0xff]
    %v121 = vld [vmem:[#allocation3 + $0xd0] sm:$0xff]
    %v122 = vld [vmem:[#allocation3 + $0xd8] sm:$0xff]
    %v123 = vld [vmem:[#allocation3 + $0xe0] sm:$0xff]
    %v124 = vld [vmem:[#allocation3 + $0xe8] sm:$0xff]
    %v125 = vld [vmem:[#allocation3 + $0xf0] sm:$0xff]
    %v126 = vld [vmem:[#allocation3 + $0xf8] sm:$0xff]
    %v127 = vunpack.c.l.bf16 %v95
    %v128 = vunpack.c.h.bf16 %v95
    %v129 = vunpack.c.l.bf16 %v96
    %v130 = vunpack.c.h.bf16 %v96
    %v131 = vunpack.c.l.bf16 %v97
    %v132 = vunpack.c.h.bf16 %v97
    %v133 = vunpack.c.l.bf16 %v98
    %v134 = vunpack.c.h.bf16 %v98
    %v135 = vunpack.c.l.bf16 %v99
    %v136 = vunpack.c.h.bf16 %v99
    %v137 = vunpack.c.l.bf16 %v100
    %v138 = vunpack.c.h.bf16 %v100
    %v139 = vunpack.c.l.bf16 %v101
    %v140 = vunpack.c.h.bf16 %v101
    %v141 = vunpack.c.l.bf16 %v102
    %v142 = vunpack.c.h.bf16 %v102
    %v143 = vunpack.c.l.bf16 %v103
    %v144 = vunpack.c.h.bf16 %v103
    %v145 = vunpack.c.l.bf16 %v104
    %v146 = vunpack.c.h.bf16 %v104
    %v147 = vunpack.c.l.bf16 %v105
    %v148 = vunpack.c.h.bf16 %v105
    %v149 = vunpack.c.l.bf16 %v106
    %v150 = vunpack.c.h.bf16 %v106
    %v151 = vunpack.c.l.bf16 %v107
    %v152 = vunpack.c.h.bf16 %v107
    %v153 = vunpack.c.l.bf16 %v108
    %v154 = vunpack.c.h.bf16 %v108
    %v155 = vunpack.c.l.bf16 %v109
    %v156 = vunpack.c.h.bf16 %v109
    %v157 = vunpack.c.l.bf16 %v110
    %v158 = vunpack.c.h.bf16 %v110
    %v159 = vunpack.c.l.bf16 %v111
    %v160 = vunpack.c.h.bf16 %v111
    %v161 = vunpack.c.l.bf16 %v112
    %v162 = vunpack.c.h.bf16 %v112
    %v163 = vunpack.c.l.bf16 %v113
    %v164 = vunpack.c.h.bf16 %v113
    %v165 = vunpack.c.l.bf16 %v114
    %v166 = vunpack.c.h.bf16 %v114
    %v167 = vunpack.c.l.bf16 %v115
    %v168 = vunpack.c.h.bf16 %v115
    %v169 = vunpack.c.l.bf16 %v116
    %v170 = vunpack.c.h.bf16 %v116
    %v171 = vunpack.c.l.bf16 %v117
    %v172 = vunpack.c.h.bf16 %v117
    %v173 = vunpack.c.l.bf16 %v118
    %v174 = vunpack.c.h.bf16 %v118
    %v175 = vunpack.c.l.bf16 %v119
    %v176 = vunpack.c.h.bf16 %v119
    %v177 = vunpack.c.l.bf16 %v120
    %v178 = vunpack.c.h.bf16 %v120
    %v179 = vunpack.c.l.bf16 %v121
    %v180 = vunpack.c.h.bf16 %v121
    %v181 = vunpack.c.l.bf16 %v122
    %v182 = vunpack.c.h.bf16 %v122
    %v183 = vunpack.c.l.bf16 %v123
    %v184 = vunpack.c.h.bf16 %v123
    %v185 = vunpack.c.l.bf16 %v124
    %v186 = vunpack.c.h.bf16 %v124
    %v187 = vunpack.c.l.bf16 %v125
    %v188 = vunpack.c.h.bf16 %v125
    %v189 = vunpack.c.l.bf16 %v126
    %v190 = vunpack.c.h.bf16 %v126
    %v191 = vld [vmem:[#allocation2] sm:$0xff]
    %v192 = vld [vmem:[#allocation2 + $0x8] sm:$0xff]
    %v193 = vld [vmem:[#allocation2 + $0x10] sm:$0xff]
    %v194 = vld [vmem:[#allocation2 + $0x18] sm:$0xff]
    %v195 = vld [vmem:[#allocation2 + $0x20] sm:$0xff]
    %v196 = vld [vmem:[#allocation2 + $0x28] sm:$0xff]
    %v197 = vld [vmem:[#allocation2 + $0x30] sm:$0xff]
    %v198 = vld [vmem:[#allocation2 + $0x38] sm:$0xff]
    %v199 = vld [vmem:[#allocation2 + $0x40] sm:$0xff]
    %v200 = vld [vmem:[#allocation2 + $0x48] sm:$0xff]
    %v201 = vld [vmem:[#allocation2 + $0x50] sm:$0xff]
    %v202 = vld [vmem:[#allocation2 + $0x58] sm:$0xff]
    %v203 = vld [vmem:[#allocation2 + $0x60] sm:$0xff]
    %v204 = vld [vmem:[#allocation2 + $0x68] sm:$0xff]
    %v205 = vld [vmem:[#allocation2 + $0x70] sm:$0xff]
    %v206 = vld [vmem:[#allocation2 + $0x78] sm:$0xff]
    %v207 = vld [vmem:[#allocation2 + $0x80] sm:$0xff]
    %v208 = vld [vmem:[#allocation2 + $0x88] sm:$0xff]
    %v209 = vld [vmem:[#allocation2 + $0x90] sm:$0xff]
    %v210 = vld [vmem:[#allocation2 + $0x98] sm:$0xff]
    %v211 = vld [vmem:[#allocation2 + $0xa0] sm:$0xff]
    %v212 = vld [vmem:[#allocation2 + $0xa8] sm:$0xff]
    %v213 = vld [vmem:[#allocation2 + $0xb0] sm:$0xff]
    %v214 = vld [vmem:[#allocation2 + $0xb8] sm:$0xff]
    %v215 = vld [vmem:[#allocation2 + $0xc0] sm:$0xff]
    %v216 = vld [vmem:[#allocation2 + $0xc8] sm:$0xff]
    %v217 = vld [vmem:[#allocation2 + $0xd0] sm:$0xff]
    %v218 = vld [vmem:[#allocation2 + $0xd8] sm:$0xff]
    %v219 = vld [vmem:[#allocation2 + $0xe0] sm:$0xff]
    %v220 = vld [vmem:[#allocation2 + $0xe8] sm:$0xff]
    %v221 = vld [vmem:[#allocation2 + $0xf0] sm:$0xff]
    %v222 = vld [vmem:[#allocation2 + $0xf8] sm:$0xff]
    %v223 = vld [vmem:[#allocation6] sm:$0xff]
    %v224 = vld [vmem:[#allocation6 + $0x8] sm:$0xff]
    %v225 = vld [vmem:[#allocation6 + $0x10] sm:$0xff]
    %v226 = vld [vmem:[#allocation6 + $0x18] sm:$0xff]
    %v227 = vld [vmem:[#allocation6 + $0x20] sm:$0xff]
    %v228 = vld [vmem:[#allocation6 + $0x28] sm:$0xff]
    %v229 = vld [vmem:[#allocation6 + $0x30] sm:$0xff]
    %v230 = vld [vmem:[#allocation6 + $0x38] sm:$0xff]
    %v231 = vld [vmem:[#allocation6 + $0x40] sm:$0xff]
    %v232 = vld [vmem:[#allocation6 + $0x48] sm:$0xff]
    %v233 = vld [vmem:[#allocation6 + $0x50] sm:$0xff]
    %v234 = vld [vmem:[#allocation6 + $0x58] sm:$0xff]
    %v235 = vld [vmem:[#allocation6 + $0x60] sm:$0xff]
    %v236 = vld [vmem:[#allocation6 + $0x68] sm:$0xff]
    %v237 = vld [vmem:[#allocation6 + $0x70] sm:$0xff]
    %v238 = vld [vmem:[#allocation6 + $0x78] sm:$0xff]
    %v239 = vld [vmem:[#allocation6 + $0x80] sm:$0xff]
    %v240 = vld [vmem:[#allocation6 + $0x88] sm:$0xff]
    %v241 = vld [vmem:[#allocation6 + $0x90] sm:$0xff]
    %v242 = vld [vmem:[#allocation6 + $0x98] sm:$0xff]
    %v243 = vld [vmem:[#allocation6 + $0xa0] sm:$0xff]
    %v244 = vld [vmem:[#allocation6 + $0xa8] sm:$0xff]
    %v245 = vld [vmem:[#allocation6 + $0xb0] sm:$0xff]
    %v246 = vld [vmem:[#allocation6 + $0xb8] sm:$0xff]
    %v247 = vld [vmem:[#allocation6 + $0xc0] sm:$0xff]
    %v248 = vld [vmem:[#allocation6 + $0xc8] sm:$0xff]
    %v249 = vld [vmem:[#allocation6 + $0xd0] sm:$0xff]
    %v250 = vld [vmem:[#allocation6 + $0xd8] sm:$0xff]
    %v251 = vld [vmem:[#allocation6 + $0xe0] sm:$0xff]
    %v252 = vld [vmem:[#allocation6 + $0xe8] sm:$0xff]
    %v253 = vld [vmem:[#allocation6 + $0xf0] sm:$0xff]
    %v254 = vld [vmem:[#allocation6 + $0xf8] sm:$0xff]
    %255 = vmatprep.subr.mxu0 0.0
    %256 = vmatpush1.msra.mxu0 %v238
    %257 = vmatprep.subr.mxu0 0.0
    %258 = vmatpush1.msra.mxu0 %v237
    %259 = vmatprep.subr.mxu0 0.0
    %260 = vmatpush1.msra.mxu0 %v236
    %261 = vmatprep.subr.mxu0 0.0
    %262 = vmatpush1.msra.mxu0 %v235
    %263 = vmatprep.subr.mxu0 0.0
    %264 = vmatpush1.msra.mxu0 %v234
    %265 = vmatprep.subr.mxu0 0.0
    %266 = vmatpush1.msra.mxu0 %v233
    %267 = vmatprep.subr.mxu0 0.0
    %268 = vmatpush1.msra.mxu0 %v232
    %269 = vmatprep.subr.mxu0 0.0
    %270 = vmatpush1.msra.mxu0 %v231
    %271 = vmatprep.subr.mxu0 0.0
    %272 = vmatpush1.msra.mxu0 %v230
    %273 = vmatprep.subr.mxu0 0.0
    %274 = vmatpush1.msra.mxu0 %v229
    %275 = vmatprep.subr.mxu0 0.0
    %276 = vmatpush1.msra.mxu0 %v228
    %277 = vmatprep.subr.mxu0 0.0
    %278 = vmatpush1.msra.mxu0 %v227
    %279 = vmatprep.subr.mxu0 0.0
    %280 = vmatpush1.msra.mxu0 %v226
    %281 = vmatprep.subr.mxu0 0.0
    %282 = vmatpush1.msra.mxu0 %v225
    %283 = vmatprep.subr.mxu0 0.0
    %284 = vmatpush1.msra.mxu0 %v224
    %285 = vmatprep.subr.mxu0 0.0
    %286 = vmatpush1.msra.mxu0 %v223
    %287 = vmatprep.subr.mxu0 0.0
    %288 = vmatpush2.msra.mxu0 %v254
    %289 = vmatprep.subr.mxu0 0.0
    %290 = vmatpush2.msra.mxu0 %v253
    %291 = vmatprep.subr.mxu0 0.0
    %292 = vmatpush2.msra.mxu0 %v252
    %293 = vmatprep.subr.mxu0 0.0
    %294 = vmatpush2.msra.mxu0 %v251
    %295 = vmatprep.subr.mxu0 0.0
    %296 = vmatpush2.msra.mxu0 %v250
    %297 = vmatprep.subr.mxu0 0.0
    %298 = vmatpush2.msra.mxu0 %v249
    %299 = vmatprep.subr.mxu0 0.0
    %300 = vmatpush2.msra.mxu0 %v248
    %301 = vmatprep.subr.mxu0 0.0
    %302 = vmatpush2.msra.mxu0 %v247
    %303 = vmatprep.subr.mxu0 0.0
    %304 = vmatpush2.msra.mxu0 %v246
    %305 = vmatprep.subr.mxu0 0.0
    %306 = vmatpush2.msra.mxu0 %v245
    %307 = vmatprep.subr.mxu0 0.0
    %308 = vmatpush2.msra.mxu0 %v244
    %309 = vmatprep.subr.mxu0 0.0
    %310 = vmatpush2.msra.mxu0 %v243
    %311 = vmatprep.subr.mxu0 0.0
    %312 = vmatpush2.msra.mxu0 %v242
    %313 = vmatprep.subr.mxu0 0.0
    %314 = vmatpush2.msra.mxu0 %v241
    %315 = vmatprep.subr.mxu0 0.0
    %316 = vmatpush2.msra.mxu0 %v240
    %317 = vmatprep.subr.mxu0 0.0
    %318 = vmatpush2.msra.mxu0 %v239
    %319 = vmatprep.mubr.f32.mxu0 %v128
    %320 = vmatmul.mubr.f32.gmra.mxu0 %v127
    %v321 = vpop.f32.mrf.mxu0
    %v322 = vadd.f32 0.0, %v321
    %v323 = vpop.f32.mrf.mxu0
    %324 = vmatprep.mubr.f32.mxu0 %v130
    %325 = vmatmul.mubr.f32.gmra.mxu0 %v129
    %v326 = vpop.f32.mrf.mxu0
    %v327 = vadd.f32 0.0, %v326
    %v328 = vpop.f32.mrf.mxu0
    %329 = vmatprep.mubr.f32.mxu0 %v132
    %330 = vmatmul.mubr.f32.gmra.mxu0 %v131
    %v331 = vpop.f32.mrf.mxu0
    %v332 = vadd.f32 0.0, %v331
    %v333 = vpop.f32.mrf.mxu0
    %334 = vmatprep.mubr.f32.mxu0 %v134
    %335 = vmatmul.mubr.f32.gmra.mxu0 %v133
    %v336 = vpop.f32.mrf.mxu0
    %v337 = vadd.f32 0.0, %v336
    %v338 = vpop.f32.mrf.mxu0
    %339 = vmatprep.mubr.f32.mxu0 %v136
    %340 = vmatmul.mubr.f32.gmra.mxu0 %v135
    %v341 = vpop.f32.mrf.mxu0
    %v342 = vadd.f32 0.0, %v341
    %v343 = vpop.f32.mrf.mxu0
    %344 = vmatprep.mubr.f32.mxu0 %v138
    %345 = vmatmul.mubr.f32.gmra.mxu0 %v137
    %v346 = vpop.f32.mrf.mxu0
    %v347 = vadd.f32 0.0, %v346
    %v348 = vpop.f32.mrf.mxu0
    %349 = vmatprep.mubr.f32.mxu0 %v140
    %350 = vmatmul.mubr.f32.gmra.mxu0 %v139
    %v351 = vpop.f32.mrf.mxu0
    %v352 = vadd.f32 0.0, %v351
    %v353 = vpop.f32.mrf.mxu0
    %354 = vmatprep.mubr.f32.mxu0 %v142
    %355 = vmatmul.mubr.f32.gmra.mxu0 %v141
    %v356 = vpop.f32.mrf.mxu0
    %v357 = vadd.f32 0.0, %v356
    %v358 = vpop.f32.mrf.mxu0
    %359 = vmatprep.mubr.f32.mxu0 %v144
    %360 = vmatmul.mubr.f32.gmra.mxu0 %v143
    %v361 = vpop.f32.mrf.mxu0
    %v362 = vadd.f32 0.0, %v361
    %v363 = vpop.f32.mrf.mxu0
    %364 = vmatprep.mubr.f32.mxu0 %v146
    %365 = vmatmul.mubr.f32.gmra.mxu0 %v145
    %v366 = vpop.f32.mrf.mxu0
    %v367 = vadd.f32 0.0, %v366
    %v368 = vpop.f32.mrf.mxu0
    %369 = vmatprep.mubr.f32.mxu0 %v148
    %370 = vmatmul.mubr.f32.gmra.mxu0 %v147
    %v371 = vpop.f32.mrf.mxu0
    %v372 = vadd.f32 0.0, %v371
    %v373 = vpop.f32.mrf.mxu0
    %374 = vmatprep.mubr.f32.mxu0 %v150
    %375 = vmatmul.mubr.f32.gmra.mxu0 %v149
    %v376 = vpop.f32.mrf.mxu0
    %v377 = vadd.f32 0.0, %v376
    %v378 = vpop.f32.mrf.mxu0
    %379 = vmatprep.mubr.f32.mxu0 %v152
    %380 = vmatmul.mubr.f32.gmra.mxu0 %v151
    %v381 = vpop.f32.mrf.mxu0
    %v382 = vadd.f32 0.0, %v381
    %v383 = vpop.f32.mrf.mxu0
    %384 = vmatprep.mubr.f32.mxu0 %v154
    %385 = vmatmul.mubr.f32.gmra.mxu0 %v153
    %v386 = vpop.f32.mrf.mxu0
    %v387 = vadd.f32 0.0, %v386
    %v388 = vpop.f32.mrf.mxu0
    %389 = vmatprep.mubr.f32.mxu0 %v156
    %390 = vmatmul.mubr.f32.gmra.mxu0 %v155
    %v391 = vpop.f32.mrf.mxu0
    %v392 = vadd.f32 0.0, %v391
    %v393 = vpop.f32.mrf.mxu0
    %394 = vmatprep.mubr.f32.mxu0 %v158
    %395 = vmatmul.mubr.f32.gmra.mxu0 %v157
    %v396 = vpop.f32.mrf.mxu0
    %v397 = vadd.f32 0.0, %v396
    %v398 = vpop.f32.mrf.mxu0
    %399 = vmatprep.mubr.f32.mxu0 %v160
    %400 = vmatmul.mubr.f32.gmra.mxu0 %v159
    %v401 = vpop.f32.mrf.mxu0
    %v402 = vadd.f32 0.0, %v401
    %v403 = vpop.f32.mrf.mxu0
    %404 = vmatprep.mubr.f32.mxu0 %v162
    %405 = vmatmul.mubr.f32.gmra.mxu0 %v161
    %v406 = vpop.f32.mrf.mxu0
    %v407 = vadd.f32 0.0, %v406
    %v408 = vpop.f32.mrf.mxu0
    %409 = vmatprep.mubr.f32.mxu0 %v164
    %410 = vmatmul.mubr.f32.gmra.mxu0 %v163
    %v411 = vpop.f32.mrf.mxu0
    %v412 = vadd.f32 0.0, %v411
    %v413 = vpop.f32.mrf.mxu0
    %414 = vmatprep.mubr.f32.mxu0 %v166
    %415 = vmatmul.mubr.f32.gmra.mxu0 %v165
    %v416 = vpop.f32.mrf.mxu0
    %v417 = vadd.f32 0.0, %v416
    %v418 = vpop.f32.mrf.mxu0
    %419 = vmatprep.mubr.f32.mxu0 %v168
    %420 = vmatmul.mubr.f32.gmra.mxu0 %v167
    %v421 = vpop.f32.mrf.mxu0
    %v422 = vadd.f32 0.0, %v421
    %v423 = vpop.f32.mrf.mxu0
    %424 = vmatprep.mubr.f32.mxu0 %v170
    %425 = vmatmul.mubr.f32.gmra.mxu0 %v169
    %v426 = vpop.f32.mrf.mxu0
    %v427 = vadd.f32 0.0, %v426
    %v428 = vpop.f32.mrf.mxu0
    %429 = vmatprep.mubr.f32.mxu0 %v172
    %430 = vmatmul.mubr.f32.gmra.mxu0 %v171
    %v431 = vpop.f32.mrf.mxu0
    %v432 = vadd.f32 0.0, %v431
    %v433 = vpop.f32.mrf.mxu0
    %434 = vmatprep.mubr.f32.mxu0 %v174
    %435 = vmatmul.mubr.f32.gmra.mxu0 %v173
    %v436 = vpop.f32.mrf.mxu0
    %v437 = vadd.f32 0.0, %v436
    %v438 = vpop.f32.mrf.mxu0
    %439 = vmatprep.mubr.f32.mxu0 %v176
    %440 = vmatmul.mubr.f32.gmra.mxu0 %v175
    %v441 = vpop.f32.mrf.mxu0
    %v442 = vadd.f32 0.0, %v441
    %v443 = vpop.f32.mrf.mxu0
    %444 = vmatprep.mubr.f32.mxu0 %v178
    %445 = vmatmul.mubr.f32.gmra.mxu0 %v177
    %v446 = vpop.f32.mrf.mxu0
    %v447 = vadd.f32 0.0, %v446
    %v448 = vpop.f32.mrf.mxu0
    %449 = vmatprep.mubr.f32.mxu0 %v180
    %450 = vmatmul.mubr.f32.gmra.mxu0 %v179
    %v451 = vpop.f32.mrf.mxu0
    %v452 = vadd.f32 0.0, %v451
    %v453 = vpop.f32.mrf.mxu0
    %454 = vmatprep.mubr.f32.mxu0 %v182
    %455 = vmatmul.mubr.f32.gmra.mxu0 %v181
    %v456 = vpop.f32.mrf.mxu0
    %v457 = vadd.f32 0.0, %v456
    %v458 = vpop.f32.mrf.mxu0
    %459 = vmatprep.mubr.f32.mxu0 %v184
    %460 = vmatmul.mubr.f32.gmra.mxu0 %v183
    %v461 = vpop.f32.mrf.mxu0
    %v462 = vadd.f32 0.0, %v461
    %v463 = vpop.f32.mrf.mxu0
    %464 = vmatprep.mubr.f32.mxu0 %v186
    %465 = vmatmul.mubr.f32.gmra.mxu0 %v185
    %v466 = vpop.f32.mrf.mxu0
    %v467 = vadd.f32 0.0, %v466
    %v468 = vpop.f32.mrf.mxu0
    %469 = vmatprep.mubr.f32.mxu0 %v188
    %470 = vmatmul.mubr.f32.gmra.mxu0 %v187
    %v471 = vpop.f32.mrf.mxu0
    %v472 = vadd.f32 0.0, %v471
    %v473 = vpop.f32.mrf.mxu0
    %474 = vmatprep.mubr.f32.mxu0 %v190
    %475 = vmatmul.mubr.f32.gmra.mxu0 %v189
    %v476 = vpop.f32.mrf.mxu0
    %v477 = vadd.f32 0.0, %v476
    %v478 = vpop.f32.mrf.mxu0
    %479 = vdwg.mxu0
    %v480 = vadd.f32 %v191, %v322
    %v481 = vadd.f32 %v192, %v327
    %v482 = vadd.f32 %v193, %v332
    %v483 = vadd.f32 %v194, %v337
    %v484 = vadd.f32 %v195, %v342
    %v485 = vadd.f32 %v196, %v347
    %v486 = vadd.f32 %v197, %v352
    %v487 = vadd.f32 %v198, %v357
    %v488 = vadd.f32 %v199, %v362
    %v489 = vadd.f32 %v200, %v367
    %v490 = vadd.f32 %v201, %v372
    %v491 = vadd.f32 %v202, %v377
    %v492 = vadd.f32 %v203, %v382
    %v493 = vadd.f32 %v204, %v387
    %v494 = vadd.f32 %v205, %v392
    %v495 = vadd.f32 %v206, %v397
    %v496 = vadd.f32 %v207, %v402
    %v497 = vadd.f32 %v208, %v407
    %v498 = vadd.f32 %v209, %v412
    %v499 = vadd.f32 %v210, %v417
    %v500 = vadd.f32 %v211, %v422
    %v501 = vadd.f32 %v212, %v427
    %v502 = vadd.f32 %v213, %v432
    %v503 = vadd.f32 %v214, %v437
    %v504 = vadd.f32 %v215, %v442
    %v505 = vadd.f32 %v216, %v447
    %v506 = vadd.f32 %v217, %v452
    %v507 = vadd.f32 %v218, %v457
    %v508 = vadd.f32 %v219, %v462
    %v509 = vadd.f32 %v220, %v467
    %v510 = vadd.f32 %v221, %v472
    %v511 = vadd.f32 %v222, %v477
    %512 = vst [vmem:[#allocation2] sm:$0xff] %v480
    %513 = vst [vmem:[#allocation2 + $0x8] sm:$0xff] %v481
    %514 = vst [vmem:[#allocation2 + $0x10] sm:$0xff] %v482
    %515 = vst [vmem:[#allocation2 + $0x18] sm:$0xff] %v483
    %516 = vst [vmem:[#allocation2 + $0x20] sm:$0xff] %v484
    %517 = vst [vmem:[#allocation2 + $0x28] sm:$0xff] %v485
    %518 = vst [vmem:[#allocation2 + $0x30] sm:$0xff] %v486
    %519 = vst [vmem:[#allocation2 + $0x38] sm:$0xff] %v487
    %520 = vst [vmem:[#allocation2 + $0x40] sm:$0xff] %v488
    %521 = vst [vmem:[#allocation2 + $0x48] sm:$0xff] %v489
    %522 = vst [vmem:[#allocation2 + $0x50] sm:$0xff] %v490
    %523 = vst [vmem:[#allocation2 + $0x58] sm:$0xff] %v491
    %524 = vst [vmem:[#allocation2 + $0x60] sm:$0xff] %v492
    %525 = vst [vmem:[#allocation2 + $0x68] sm:$0xff] %v493
    %526 = vst [vmem:[#allocation2 + $0x70] sm:$0xff] %v494
    %527 = vst [vmem:[#allocation2 + $0x78] sm:$0xff] %v495
    %528 = vst [vmem:[#allocation2 + $0x80] sm:$0xff] %v496
    %529 = vst [vmem:[#allocation2 + $0x88] sm:$0xff] %v497
    %530 = vst [vmem:[#allocation2 + $0x90] sm:$0xff] %v498
    %531 = vst [vmem:[#allocation2 + $0x98] sm:$0xff] %v499
    %532 = vst [vmem:[#allocation2 + $0xa0] sm:$0xff] %v500
    %533 = vst [vmem:[#allocation2 + $0xa8] sm:$0xff] %v501
    %534 = vst [vmem:[#allocation2 + $0xb0] sm:$0xff] %v502
    %535 = vst [vmem:[#allocation2 + $0xb8] sm:$0xff] %v503
    %536 = vst [vmem:[#allocation2 + $0xc0] sm:$0xff] %v504
    %537 = vst [vmem:[#allocation2 + $0xc8] sm:$0xff] %v505
    %538 = vst [vmem:[#allocation2 + $0xd0] sm:$0xff] %v506
    %539 = vst [vmem:[#allocation2 + $0xd8] sm:$0xff] %v507
    %540 = vst [vmem:[#allocation2 + $0xe0] sm:$0xff] %v508
    %541 = vst [vmem:[#allocation2 + $0xe8] sm:$0xff] %v509
    %542 = vst [vmem:[#allocation2 + $0xf0] sm:$0xff] %v510
    %543 = vst [vmem:[#allocation2 + $0xf8] sm:$0xff] %v511
    // Predicated region
    $region34: #{tpu_custom_call.1} parent=1 // pred_check
      %p544 = pneg %p59
    $region35: #{tpu_custom_call.1} parent=1 // pred_check_branch
      %546 = sbr.rel (%p544) target = $region37
    $region36: #{tpu_custom_call.1} parent=1 // pred_region
      %v547 = vld [vmem:[#allocation2] sm:$0xff]
      %v548 = vld [vmem:[#allocation2 + $0x8] sm:$0xff]
      %v549 = vld [vmem:[#allocation2 + $0x10] sm:$0xff]
      %v550 = vld [vmem:[#allocation2 + $0x18] sm:$0xff]
      %v551 = vld [vmem:[#allocation2 + $0x20] sm:$0xff]
      %v552 = vld [vmem:[#allocation2 + $0x28] sm:$0xff]
      %v553 = vld [vmem:[#allocation2 + $0x30] sm:$0xff]
      %v554 = vld [vmem:[#allocation2 + $0x38] sm:$0xff]
      %v555 = vld [vmem:[#allocation2 + $0x40] sm:$0xff]
      %v556 = vld [vmem:[#allocation2 + $0x48] sm:$0xff]
      %v557 = vld [vmem:[#allocation2 + $0x50] sm:$0xff]
      %v558 = vld [vmem:[#allocation2 + $0x58] sm:$0xff]
      %v559 = vld [vmem:[#allocation2 + $0x60] sm:$0xff]
      %v560 = vld [vmem:[#allocation2 + $0x68] sm:$0xff]
      %v561 = vld [vmem:[#allocation2 + $0x70] sm:$0xff]
      %v562 = vld [vmem:[#allocation2 + $0x78] sm:$0xff]
      %v563 = vld [vmem:[#allocation2 + $0x80] sm:$0xff]
      %v564 = vld [vmem:[#allocation2 + $0x88] sm:$0xff]
      %v565 = vld [vmem:[#allocation2 + $0x90] sm:$0xff]
      %v566 = vld [vmem:[#allocation2 + $0x98] sm:$0xff]
      %v567 = vld [vmem:[#allocation2 + $0xa0] sm:$0xff]
      %v568 = vld [vmem:[#allocation2 + $0xa8] sm:$0xff]
      %v569 = vld [vmem:[#allocation2 + $0xb0] sm:$0xff]
      %v570 = vld [vmem:[#allocation2 + $0xb8] sm:$0xff]
      %v571 = vld [vmem:[#allocation2 + $0xc0] sm:$0xff]
      %v572 = vld [vmem:[#allocation2 + $0xc8] sm:$0xff]
      %v573 = vld [vmem:[#allocation2 + $0xd0] sm:$0xff]
      %v574 = vld [vmem:[#allocation2 + $0xd8] sm:$0xff]
      %v575 = vld [vmem:[#allocation2 + $0xe0] sm:$0xff]
      %v576 = vld [vmem:[#allocation2 + $0xe8] sm:$0xff]
      %v577 = vld [vmem:[#allocation2 + $0xf0] sm:$0xff]
      %v578 = vld [vmem:[#allocation2 + $0xf8] sm:$0xff]
      %v579 = vld [vmem:[#allocation8] sm:$0xff]
      %v580 = vld [vmem:[#allocation8 + $0x8] sm:$0xff]
      %v581 = vld [vmem:[#allocation8 + $0x10] sm:$0xff]
      %v582 = vld [vmem:[#allocation8 + $0x18] sm:$0xff]
      %v583 = vld [vmem:[#allocation8 + $0x20] sm:$0xff]
      %v584 = vld [vmem:[#allocation8 + $0x28] sm:$0xff]
      %v585 = vld [vmem:[#allocation8 + $0x30] sm:$0xff]
      %v586 = vld [vmem:[#allocation8 + $0x38] sm:$0xff]
      %v587 = vld [vmem:[#allocation8 + $0x40] sm:$0xff]
      %v588 = vld [vmem:[#allocation8 + $0x48] sm:$0xff]
      %v589 = vld [vmem:[#allocation8 + $0x50] sm:$0xff]
      %v590 = vld [vmem:[#allocation8 + $0x58] sm:$0xff]
      %v591 = vld [vmem:[#allocation8 + $0x60] sm:$0xff]
      %v592 = vld [vmem:[#allocation8 + $0x68] sm:$0xff]
      %v593 = vld [vmem:[#allocation8 + $0x70] sm:$0xff]
      %v594 = vld [vmem:[#allocation8 + $0x78] sm:$0xff]
      %v595 = vld [vmem:[%s3] sm:$0x1]
      %v597 = vlaneseq
      %v598 = vshrl.u32 %v597, 7
      %v599 = vsub.s32 0, %v598
      %v600 = vrot.slane %v595, %v599
      %602 = vmatprep.subr.mxu0 0.0
      %603 = vmatpush1.msra.mxu0 %v594
      %604 = vmatprep.subr.mxu0 0.0
      %605 = vmatpush1.msra.mxu0 %v593
      %606 = vmatprep.subr.mxu0 0.0
      %607 = vmatpush1.msra.mxu0 %v592
      %608 = vmatprep.subr.mxu0 0.0
      %609 = vmatpush1.msra.mxu0 %v591
      %610 = vmatprep.subr.mxu0 0.0
      %611 = vmatpush1.msra.mxu0 %v590
      %612 = vmatprep.subr.mxu0 0.0
      %613 = vmatpush1.msra.mxu0 %v589
      %614 = vmatprep.subr.mxu0 0.0
      %615 = vmatpush1.msra.mxu0 %v588
      %616 = vmatprep.subr.mxu0 0.0
      %617 = vmatpush1.msra.mxu0 %v587
      %618 = vmatprep.subr.mxu0 0.0
      %619 = vmatpush1.msra.mxu0 %v586
      %620 = vmatprep.subr.mxu0 0.0
      %621 = vmatpush1.msra.mxu0 %v585
      %622 = vmatprep.subr.mxu0 0.0
      %623 = vmatpush1.msra.mxu0 %v584
      %624 = vmatprep.subr.mxu0 0.0
      %625 = vmatpush1.msra.mxu0 %v583
      %626 = vmatprep.subr.mxu0 0.0
      %627 = vmatpush1.msra.mxu0 %v582
      %628 = vmatprep.subr.mxu0 0.0
      %629 = vmatpush1.msra.mxu0 %v581
      %630 = vmatprep.subr.mxu0 0.0
      %631 = vmatpush1.msra.mxu0 %v580
      %632 = vmatprep.subr.mxu0 0.0
      %633 = vmatpush1.msra.mxu0 %v579
      %634 = vmatprep.subr.mxu0 0.0
      %635 = vmatpush2.msra.mxu0 0.0
      %636 = vmatprep.subr.mxu0 0.0
      %637 = vmatpush2.msra.mxu0 0.0
      %638 = vmatprep.subr.mxu0 0.0
      %639 = vmatpush2.msra.mxu0 0.0
      %640 = vmatprep.subr.mxu0 0.0
      %641 = vmatpush2.msra.mxu0 0.0
      %642 = vmatprep.subr.mxu0 0.0
      %643 = vmatpush2.msra.mxu0 0.0
      %644 = vmatprep.subr.mxu0 0.0
      %645 = vmatpush2.msra.mxu0 0.0
      %646 = vmatprep.subr.mxu0 0.0
      %647 = vmatpush2.msra.mxu0 0.0
      %648 = vmatprep.subr.mxu0 0.0
      %649 = vmatpush2.msra.mxu0 0.0
      %650 = vmatprep.subr.mxu0 0.0
      %651 = vmatpush2.msra.mxu0 0.0
      %652 = vmatprep.subr.mxu0 0.0
      %653 = vmatpush2.msra.mxu0 0.0
      %654 = vmatprep.subr.mxu0 0.0
      %655 = vmatpush2.msra.mxu0 0.0
      %656 = vmatprep.subr.mxu0 0.0
      %657 = vmatpush2.msra.mxu0 0.0
      %658 = vmatprep.subr.mxu0 0.0
      %659 = vmatpush2.msra.mxu0 0.0
      %660 = vmatprep.subr.mxu0 0.0
      %661 = vmatpush2.msra.mxu0 0.0
      %662 = vmatprep.subr.mxu0 0.0
      %663 = vmatpush2.msra.mxu0 0.0
      %664 = vmatprep.subr.mxu0 0.0
      %665 = vmatpush2.msra.mxu0 0.0
      %666 = vmatprep.mubr.f32.mxu0 0.0
      %667 = vmatmul.mubr.f32.gmra.mxu0 %v547
      %v668 = vpop.f32.mrf.mxu0
      %v669 = vadd.f32 %v600, %v668
      %v670 = vpop.f32.mrf.mxu0
      %671 = vmatprep.mubr.f32.mxu0 0.0
      %672 = vmatmul.mubr.f32.gmra.mxu0 %v548
      %v673 = vpop.f32.mrf.mxu0
      %v674 = vadd.f32 %v600, %v673
      %v675 = vpop.f32.mrf.mxu0
      %676 = vmatprep.mubr.f32.mxu0 0.0
      %677 = vmatmul.mubr.f32.gmra.mxu0 %v549
      %v678 = vpop.f32.mrf.mxu0
      %v679 = vadd.f32 %v600, %v678
      %v680 = vpop.f32.mrf.mxu0
      %681 = vmatprep.mubr.f32.mxu0 0.0
      %682 = vmatmul.mubr.f32.gmra.mxu0 %v550
      %v683 = vpop.f32.mrf.mxu0
      %v684 = vadd.f32 %v600, %v683
      %v685 = vpop.f32.mrf.mxu0
      %686 = vmatprep.mubr.f32.mxu0 0.0
      %687 = vmatmul.mubr.f32.gmra.mxu0 %v551
      %v688 = vpop.f32.mrf.mxu0
      %v689 = vadd.f32 %v600, %v688
      %v690 = vpop.f32.mrf.mxu0
      %691 = vmatprep.mubr.f32.mxu0 0.0
      %692 = vmatmul.mubr.f32.gmra.mxu0 %v552
      %v693 = vpop.f32.mrf.mxu0
      %v694 = vadd.f32 %v600, %v693
      %v695 = vpop.f32.mrf.mxu0
      %696 = vmatprep.mubr.f32.mxu0 0.0
      %697 = vmatmul.mubr.f32.gmra.mxu0 %v553
      %v698 = vpop.f32.mrf.mxu0
      %v699 = vadd.f32 %v600, %v698
      %v700 = vpop.f32.mrf.mxu0
      %701 = vmatprep.mubr.f32.mxu0 0.0
      %702 = vmatmul.mubr.f32.gmra.mxu0 %v554
      %v703 = vpop.f32.mrf.mxu0
      %v704 = vadd.f32 %v600, %v703
      %v705 = vpop.f32.mrf.mxu0
      %706 = vmatprep.mubr.f32.mxu0 0.0
      %707 = vmatmul.mubr.f32.gmra.mxu0 %v555
      %v708 = vpop.f32.mrf.mxu0
      %v709 = vadd.f32 %v600, %v708
      %v710 = vpop.f32.mrf.mxu0
      %711 = vmatprep.mubr.f32.mxu0 0.0
      %712 = vmatmul.mubr.f32.gmra.mxu0 %v556
      %v713 = vpop.f32.mrf.mxu0
      %v714 = vadd.f32 %v600, %v713
      %v715 = vpop.f32.mrf.mxu0
      %716 = vmatprep.mubr.f32.mxu0 0.0
      %717 = vmatmul.mubr.f32.gmra.mxu0 %v557
      %v718 = vpop.f32.mrf.mxu0
      %v719 = vadd.f32 %v600, %v718
      %v720 = vpop.f32.mrf.mxu0
      %721 = vmatprep.mubr.f32.mxu0 0.0
      %722 = vmatmul.mubr.f32.gmra.mxu0 %v558
      %v723 = vpop.f32.mrf.mxu0
      %v724 = vadd.f32 %v600, %v723
      %v725 = vpop.f32.mrf.mxu0
      %726 = vmatprep.mubr.f32.mxu0 0.0
      %727 = vmatmul.mubr.f32.gmra.mxu0 %v559
      %v728 = vpop.f32.mrf.mxu0
      %v729 = vadd.f32 %v600, %v728
      %v730 = vpop.f32.mrf.mxu0
      %731 = vmatprep.mubr.f32.mxu0 0.0
      %732 = vmatmul.mubr.f32.gmra.mxu0 %v560
      %v733 = vpop.f32.mrf.mxu0
      %v734 = vadd.f32 %v600, %v733
      %v735 = vpop.f32.mrf.mxu0
      %736 = vmatprep.mubr.f32.mxu0 0.0
      %737 = vmatmul.mubr.f32.gmra.mxu0 %v561
      %v738 = vpop.f32.mrf.mxu0
      %v739 = vadd.f32 %v600, %v738
      %v740 = vpop.f32.mrf.mxu0
      %741 = vmatprep.mubr.f32.mxu0 0.0
      %742 = vmatmul.mubr.f32.gmra.mxu0 %v562
      %v743 = vpop.f32.mrf.mxu0
      %v744 = vadd.f32 %v600, %v743
      %v745 = vpop.f32.mrf.mxu0
      %746 = vmatprep.mubr.f32.mxu0 0.0
      %747 = vmatmul.mubr.f32.gmra.mxu0 %v563
      %v748 = vpop.f32.mrf.mxu0
      %v749 = vadd.f32 %v600, %v748
      %v750 = vpop.f32.mrf.mxu0
      %751 = vmatprep.mubr.f32.mxu0 0.0
      %752 = vmatmul.mubr.f32.gmra.mxu0 %v564
      %v753 = vpop.f32.mrf.mxu0
      %v754 = vadd.f32 %v600, %v753
      %v755 = vpop.f32.mrf.mxu0
      %756 = vmatprep.mubr.f32.mxu0 0.0
      %757 = vmatmul.mubr.f32.gmra.mxu0 %v565
      %v758 = vpop.f32.mrf.mxu0
      %v759 = vadd.f32 %v600, %v758
      %v760 = vpop.f32.mrf.mxu0
      %761 = vmatprep.mubr.f32.mxu0 0.0
      %762 = vmatmul.mubr.f32.gmra.mxu0 %v566
      %v763 = vpop.f32.mrf.mxu0
      %v764 = vadd.f32 %v600, %v763
      %v765 = vpop.f32.mrf.mxu0
      %766 = vmatprep.mubr.f32.mxu0 0.0
      %767 = vmatmul.mubr.f32.gmra.mxu0 %v567
      %v768 = vpop.f32.mrf.mxu0
      %v769 = vadd.f32 %v600, %v768
      %v770 = vpop.f32.mrf.mxu0
      %771 = vmatprep.mubr.f32.mxu0 0.0
      %772 = vmatmul.mubr.f32.gmra.mxu0 %v568
      %v773 = vpop.f32.mrf.mxu0
      %v774 = vadd.f32 %v600, %v773
      %v775 = vpop.f32.mrf.mxu0
      %776 = vmatprep.mubr.f32.mxu0 0.0
      %777 = vmatmul.mubr.f32.gmra.mxu0 %v569
      %v778 = vpop.f32.mrf.mxu0
      %v779 = vadd.f32 %v600, %v778
      %v780 = vpop.f32.mrf.mxu0
      %781 = vmatprep.mubr.f32.mxu0 0.0
      %782 = vmatmul.mubr.f32.gmra.mxu0 %v570
      %v783 = vpop.f32.mrf.mxu0
      %v784 = vadd.f32 %v600, %v783
      %v785 = vpop.f32.mrf.mxu0
      %786 = vmatprep.mubr.f32.mxu0 0.0
      %787 = vmatmul.mubr.f32.gmra.mxu0 %v571
      %v788 = vpop.f32.mrf.mxu0
      %v789 = vadd.f32 %v600, %v788
      %v790 = vpop.f32.mrf.mxu0
      %791 = vmatprep.mubr.f32.mxu0 0.0
      %792 = vmatmul.mubr.f32.gmra.mxu0 %v572
      %v793 = vpop.f32.mrf.mxu0
      %v794 = vadd.f32 %v600, %v793
      %v795 = vpop.f32.mrf.mxu0
      %796 = vmatprep.mubr.f32.mxu0 0.0
      %797 = vmatmul.mubr.f32.gmra.mxu0 %v573
      %v798 = vpop.f32.mrf.mxu0
      %v799 = vadd.f32 %v600, %v798
      %v800 = vpop.f32.mrf.mxu0
      %801 = vmatprep.mubr.f32.mxu0 0.0
      %802 = vmatmul.mubr.f32.gmra.mxu0 %v574
      %v803 = vpop.f32.mrf.mxu0
      %v804 = vadd.f32 %v600, %v803
      %v805 = vpop.f32.mrf.mxu0
      %806 = vmatprep.mubr.f32.mxu0 0.0
      %807 = vmatmul.mubr.f32.gmra.mxu0 %v575
      %v808 = vpop.f32.mrf.mxu0
      %v809 = vadd.f32 %v600, %v808
      %v810 = vpop.f32.mrf.mxu0
      %811 = vmatprep.mubr.f32.mxu0 0.0
      %812 = vmatmul.mubr.f32.gmra.mxu0 %v576
      %v813 = vpop.f32.mrf.mxu0
      %v814 = vadd.f32 %v600, %v813
      %v815 = vpop.f32.mrf.mxu0
      %816 = vmatprep.mubr.f32.mxu0 0.0
      %817 = vmatmul.mubr.f32.gmra.mxu0 %v577
      %v818 = vpop.f32.mrf.mxu0
      %v819 = vadd.f32 %v600, %v818
      %v820 = vpop.f32.mrf.mxu0
      %821 = vmatprep.mubr.f32.mxu0 0.0
      %822 = vmatmul.mubr.f32.gmra.mxu0 %v578
      %v823 = vpop.f32.mrf.mxu0
      %v824 = vadd.f32 %v600, %v823
      %v825 = vpop.f32.mrf.mxu0
      %826 = vdwg.mxu0
      %v827 = vmax.f32 %v669, 0.0
      %v828 = vmax.f32 %v674, 0.0
      %v829 = vmax.f32 %v679, 0.0
      %v830 = vmax.f32 %v684, 0.0
      %v831 = vmax.f32 %v689, 0.0
      %v832 = vmax.f32 %v694, 0.0
      %v833 = vmax.f32 %v699, 0.0
      %v834 = vmax.f32 %v704, 0.0
      %v835 = vmax.f32 %v709, 0.0
      %v836 = vmax.f32 %v714, 0.0
      %v837 = vmax.f32 %v719, 0.0
      %v838 = vmax.f32 %v724, 0.0
      %v839 = vmax.f32 %v729, 0.0
      %v840 = vmax.f32 %v734, 0.0
      %v841 = vmax.f32 %v739, 0.0
      %v842 = vmax.f32 %v744, 0.0
      %v843 = vmax.f32 %v749, 0.0
      %v844 = vmax.f32 %v754, 0.0
      %v845 = vmax.f32 %v759, 0.0
      %v846 = vmax.f32 %v764, 0.0
      %v847 = vmax.f32 %v769, 0.0
      %v848 = vmax.f32 %v774, 0.0
      %v849 = vmax.f32 %v779, 0.0
      %v850 = vmax.f32 %v784, 0.0
      %v851 = vmax.f32 %v789, 0.0
      %v852 = vmax.f32 %v794, 0.0
      %v853 = vmax.f32 %v799, 0.0
      %v854 = vmax.f32 %v804, 0.0
      %v855 = vmax.f32 %v809, 0.0
      %v856 = vmax.f32 %v814, 0.0
      %v857 = vmax.f32 %v819, 0.0
      %v858 = vmax.f32 %v824, 0.0
      %859 = vst [vmem:[#allocation9] sm:$0xff] %v827
      %860 = vst [vmem:[#allocation9 + $0x8] sm:$0xff] %v828
      %861 = vst [vmem:[#allocation9 + $0x10] sm:$0xff] %v829
      %862 = vst [vmem:[#allocation9 + $0x18] sm:$0xff] %v830
      %863 = vst [vmem:[#allocation9 + $0x20] sm:$0xff] %v831
      %864 = vst [vmem:[#allocation9 + $0x28] sm:$0xff] %v832
      %865 = vst [vmem:[#allocation9 + $0x30] sm:$0xff] %v833
      %866 = vst [vmem:[#allocation9 + $0x38] sm:$0xff] %v834
      %867 = vst [vmem:[#allocation9 + $0x40] sm:$0xff] %v835
      %868 = vst [vmem:[#allocation9 + $0x48] sm:$0xff] %v836
      %869 = vst [vmem:[#allocation9 + $0x50] sm:$0xff] %v837
      %870 = vst [vmem:[#allocation9 + $0x58] sm:$0xff] %v838
      %871 = vst [vmem:[#allocation9 + $0x60] sm:$0xff] %v839
      %872 = vst [vmem:[#allocation9 + $0x68] sm:$0xff] %v840
      %873 = vst [vmem:[#allocation9 + $0x70] sm:$0xff] %v841
      %874 = vst [vmem:[#allocation9 + $0x78] sm:$0xff] %v842
      %875 = vst [vmem:[#allocation9 + $0x80] sm:$0xff] %v843
      %876 = vst [vmem:[#allocation9 + $0x88] sm:$0xff] %v844
      %877 = vst [vmem:[#allocation9 + $0x90] sm:$0xff] %v845
      %878 = vst [vmem:[#allocation9 + $0x98] sm:$0xff] %v846
      %879 = vst [vmem:[#allocation9 + $0xa0] sm:$0xff] %v847
      %880 = vst [vmem:[#allocation9 + $0xa8] sm:$0xff] %v848
      %881 = vst [vmem:[#allocation9 + $0xb0] sm:$0xff] %v849
      %882 = vst [vmem:[#allocation9 + $0xb8] sm:$0xff] %v850
      %883 = vst [vmem:[#allocation9 + $0xc0] sm:$0xff] %v851
      %884 = vst [vmem:[#allocation9 + $0xc8] sm:$0xff] %v852
      %885 = vst [vmem:[#allocation9 + $0xd0] sm:$0xff] %v853
      %886 = vst [vmem:[#allocation9 + $0xd8] sm:$0xff] %v854
      %887 = vst [vmem:[#allocation9 + $0xe0] sm:$0xff] %v855
      %888 = vst [vmem:[#allocation9 + $0xe8] sm:$0xff] %v856
      %889 = vst [vmem:[#allocation9 + $0xf0] sm:$0xff] %v857
      %890 = vst [vmem:[#allocation9 + $0xf8] sm:$0xff] %v858
    $region37: #{tpu_custom_call.1} parent=1 // pred_fallthru
      _
    // Predicated region
    $region38: #{tpu_custom_call.1} parent=1 // pred_check
      _
    $region39: #{tpu_custom_call.1} parent=1 // pred_check_branch
      %892 = sbr.rel (0) target = $region41
    $region40: #{tpu_custom_call.1} parent=1 // pred_region
      %s894 = ssub.s32 4096, 4096
      %895 = vsyncadd [#allocation5], %s894
      %s896 = sshll.u32 [#allocation9], 4
      %s897 = int_to_ptr.vmem [resolvable:$true] %s896
      %902 = dma.vmem_to_hbm [thread:$0]  %s897, 4096, %s4, [#allocation5], 128, 128, 8
    $region41: #{tpu_custom_call.1} parent=1 // pred_fallthru
      _
    // Predicated region
    $region42: #{tpu_custom_call.1} parent=1 // pred_check
      _
    $region43: #{tpu_custom_call.1} parent=1 // pred_check_branch
      %904 = sbr.rel (0) target = $region45
    $region44: #{tpu_custom_call.1} parent=1 // pred_region
      %905 = dma.done [#allocation5], 4096
    $region45: #{tpu_custom_call.1} parent=1 // pred_fallthru
      _
    %906 = vsyncpa [#allocation4], 1
    %907 = vsyncpa [#allocation7], 1
    %908 = vsyncpa [#allocation5], 1

</llo_original>
